<compile_context>
chip_gen: v6e
topology: v6e:2x2x1
jax: 0.10.0
libtpu: 0.0.40
codegen_flags: <defaults>
</compile_context>

<pallas_src>
import functools

import jax
import jax.numpy as jnp
from jax.experimental import pallas as pl
from jax.experimental.pallas import tpu as pltpu  # noqa: F401  (TPU backend assumed)

C_PAD = 128  # lane-dense channel padding (one full vreg lane width)


# ----------------------------- Pallas kernel ------------------------------- #

def _fused_sage_kernel(*refs, num_layers):
    """All SAGE layers fused.  Per layer i:
         agg = A_i @ h                          (row-normalized mean aggregation)
         out = [agg, h[:n_tgt]] @ [W_l; W_r]_i  (merged lin_l / lin_r projections)
         out = out * scale_i + shift_i ; ReLU   (non-final: eval BN, bias folded)
         out = out + shift_i                    (final layer: bias only)
    """
    nl = num_layers
    a_refs = refs[0:nl]
    x_ref = refs[nl]
    w_refs = refs[nl + 1:2 * nl + 1]
    scale_refs = refs[2 * nl + 1:3 * nl]        # nl - 1 of these (BN layers)
    shift_refs = refs[3 * nl:4 * nl]
    o_ref = refs[4 * nl]

    h = x_ref[...]                              # f32 [n_src_0, C_PAD]
    for i in range(nl):
        a = a_refs[i][...]                      # f32 [n_tgt_i, n_src_i]
        n_tgt = a.shape[0]
        # mean aggregation as a dense matmul on the MXU (bf16 in, f32 accumulate)
        agg = jnp.dot(a.astype(jnp.bfloat16), h.astype(jnp.bfloat16),
                      preferred_element_type=jnp.float32)
        x_tgt = h[:n_tgt]                       # static slice (layered sampling)
        # merged projection: single MXU push over the stacked weight
        cat = jnp.concatenate([agg, x_tgt], axis=1)        # [n_tgt, 2*C_PAD]
        out = jnp.dot(cat.astype(jnp.bfloat16), w_refs[i][...],
                      preferred_element_type=jnp.float32)
        if i != nl - 1:
            # eval-mode BatchNorm1d folded (bias already in shift), then ReLU
            out = out * scale_refs[i][...] + shift_refs[i][...]
            out = jnp.maximum(out, 0.0)
            # F.dropout(training=False) is identity in eval mode
        else:
            out = out + shift_refs[i][...]      # final layer: bias only
        h = out
    o_ref[...] = h.astype(o_ref.dtype)


def sage_forward(x_pad, A_list, w_cats, scales, shifts):
    """Run the whole SAGE forward (all layers) as a single Pallas call."""
    num_layers = len(A_list)
    n_tgt_last = A_list[-1].shape[0]

    kernel = functools.partial(_fused_sage_kernel, num_layers=num_layers)

    def full(shape):
        # single full-array block (no grid) per operand
        return pl.BlockSpec(shape, lambda: tuple(0 for _ in shape))

    inputs = [*A_list, x_pad, *w_cats, *scales, *shifts]
    in_specs = [full(a.shape) for a in inputs]

    # advisory cost hint so XLA schedules surrounding glue around the call
    flops = 0
    for A in A_list:
        n_t, n_s = A.shape
        flops += 2 * n_t * n_s * C_PAD            # aggregation matmul
        flops += 2 * n_t * (2 * C_PAD) * C_PAD    # merged projection matmul
    bytes_accessed = sum(a.size * a.dtype.itemsize for a in inputs)
    bytes_accessed += n_tgt_last * C_PAD * 4

    return pl.pallas_call(
        kernel,
        out_shape=jax.ShapeDtypeStruct((n_tgt_last, C_PAD), jnp.float32),
        in_specs=in_specs,
        out_specs=full((n_tgt_last, C_PAD)),
        cost_estimate=pl.CostEstimate(flops=flops, transcendentals=0,
                                      bytes_accessed=bytes_accessed),
    )(*inputs)


# ------------------------------ glue (JAX) --------------------------------- #

def dense_mean_adjacency(edge_index, size):
    """Row-normalized dense adjacency [n_tgt, n_src] for mean aggregation,
    built with one-hot matmuls (MXU) instead of a serialized scatter-add."""
    n_src, n_tgt = size
    src, tgt = edge_index[0], edge_index[1]
    t_oh = jax.nn.one_hot(tgt, n_tgt, dtype=jnp.float32)   # [E, n_tgt]
    s_oh = jax.nn.one_hot(src, n_src, dtype=jnp.float32)   # [E, n_src]
    counts = jnp.dot(t_oh.T, s_oh)                          # multi-edge counts
    deg = counts.sum(axis=1, keepdims=True)
    return counts / jnp.maximum(deg, 1.0)                   # isolated tgt -> 0 row


def init_sage_params(key, in_channels, hidden_channels, out_channels,
                     num_layers):
    """Deterministic synthetic parameters mirroring the torch module shapes,
    zero-padded to C_PAD lanes, with [W_l; W_r] stacked and bias folded into
    the (eval-mode) BN shift."""
    dims = ([in_channels] + [hidden_channels] * (num_layers - 1)
            + [out_channels])
    eps = 1e-5
    w_cats, scales, shifts = [], [], []
    for i in range(num_layers):
        c_in, c_out = dims[i], dims[i + 1]
        key, k1, k2, k3 = jax.random.split(key, 4)
        w_l = jax.random.normal(k1, (c_in, c_out), jnp.float32) * 0.1
        w_r = jax.random.normal(k2, (c_in, c_out), jnp.float32) * 0.1
        b = jax.random.normal(k3, (1, c_out), jnp.float32) * 0.1

        # zero-pad channels to C_PAD and stack [W_l; W_r] -> [2*C_PAD, C_PAD]
        wl_p = jnp.zeros((C_PAD, C_PAD), jnp.float32).at[:c_in, :c_out].set(w_l)
        wr_p = jnp.zeros((C_PAD, C_PAD), jnp.float32).at[:c_in, :c_out].set(w_r)
        w_cats.append(jnp.concatenate([wl_p, wr_p], axis=0).astype(jnp.bfloat16))

        b_p = jnp.zeros((1, C_PAD), jnp.float32).at[:, :c_out].set(b)
        if i != num_layers - 1:
            # BatchNorm1d(c_out) after reset: gamma=1, beta=0, mean=0, var=1
            scale = jnp.ones((c_out,), jnp.float32) / jnp.sqrt(1.0 + eps)
            shift = jnp.zeros((c_out,), jnp.float32)
            scale_p = jnp.ones((1, C_PAD), jnp.float32).at[0, :c_out].set(scale)
            shift_p = jnp.zeros((1, C_PAD), jnp.float32).at[0, :c_out].set(shift)
            # fold conv bias into BN shift: (y + b)*s + t = y*s + (b*s + t)
            shifts.append(b_p * scale_p + shift_p)
            scales.append(scale_p)
        else:
            shifts.append(b_p)   # final layer: bias only
    return w_cats, scales, shifts


# --------------------------------- main ------------------------------------ #

if __name__ == "__main__":
    key = jax.random.PRNGKey(0)

    in_channels, hidden_channels, out_channels = 8, 32, 16
    num_layers = 3
    dropout = 0.5  # unused in eval mode

    # Layered sampled node counts (bipartite per layer): 64 -> 32 -> 16 -> 8
    node_counts = [64, 32, 16, 8]
    num_edges = [128, 64, 32]

    key, kx = jax.random.split(key)
    x = jax.random.normal(kx, (node_counts[0], in_channels), jnp.float32)
    x_pad = (jnp.zeros((node_counts[0], C_PAD), jnp.float32)
             .at[:, :in_channels].set(x))

    A_list = []
    for i in range(num_layers):
        n_src, n_tgt = node_counts[i], node_counts[i + 1]
        key, ks, kt = jax.random.split(key, 3)
        src = jax.random.randint(ks, (num_edges[i],), 0, n_src)
        tgt = jax.random.randint(kt, (num_edges[i],), 0, n_tgt)
        edge_index = jnp.stack([src, tgt], axis=0)
        A_list.append(dense_mean_adjacency(edge_index, (n_src, n_tgt)))

    key, kp = jax.random.split(key)
    w_cats, scales, shifts = init_sage_params(kp, in_channels, hidden_channels,
                                              out_channels, num_layers)

    out_pad = sage_forward(x_pad, A_list, w_cats, scales, shifts)
    out = out_pad[:, :out_channels]      # drop lane padding
    out = jax.block_until_ready(out)
    assert out.shape == (node_counts[-1], out_channels), out.shape
    print("KERNEL_OK")
</pallas_src>

<mosaic_0001>
module attributes {stable_mosaic.version = 11 : i64} {
  func.func @_fused_sage_kernel(%arg0: memref<32x64xf32, #tpu.memory_space<vmem>>, %arg1: memref<16x32xf32, #tpu.memory_space<vmem>>, %arg2: memref<8x16xf32, #tpu.memory_space<vmem>>, %arg3: memref<64x128xf32, #tpu.memory_space<vmem>>, %arg4: memref<256x128xbf16, #tpu.memory_space<vmem>>, %arg5: memref<256x128xbf16, #tpu.memory_space<vmem>>, %arg6: memref<256x128xbf16, #tpu.memory_space<vmem>>, %arg7: memref<1x128xf32, #tpu.memory_space<vmem>>, %arg8: memref<1x128xf32, #tpu.memory_space<vmem>>, %arg9: memref<1x128xf32, #tpu.memory_space<vmem>>, %arg10: memref<1x128xf32, #tpu.memory_space<vmem>>, %arg11: memref<1x128xf32, #tpu.memory_space<vmem>>, %arg12: memref<8x128xf32, #tpu.memory_space<vmem>>) attributes {dimension_semantics = [], scalar_prefetch = 0 : i64, scratch_operands = 0 : i64, tpu.core_type = #tpu.core_type<tc>} {
    %c0 = arith.constant 0 : index
    %c0_0 = arith.constant 0 : index
    %0 = vector.load %arg3[%c0, %c0_0] : memref<64x128xf32, #tpu.memory_space<vmem>>, vector<64x128xf32>
    %c0_1 = arith.constant 0 : index
    %c0_2 = arith.constant 0 : index
    %1 = vector.load %arg0[%c0_1, %c0_2] : memref<32x64xf32, #tpu.memory_space<vmem>>, vector<32x64xf32>
    %2 = arith.truncf %1 : vector<32x64xf32> to vector<32x64xbf16>
    %3 = arith.truncf %0 : vector<64x128xf32> to vector<64x128xbf16>
    %cst = arith.constant dense<0.000000e+00> : vector<32x128xf32>
    %4 = tpu.matmul %2, %3, %cst {dimension_numbers = #tpu.dot_dimension_numbers<[1], [0], [0], [1], [0, 0, 1, 1], [], []>} : vector<32x64xbf16>, vector<64x128xbf16>, vector<32x128xf32> -> vector<32x128xf32>
    %5 = vector.extract_strided_slice %0 {offsets = [0, 0], sizes = [32, 128], strides = [1, 1]} : vector<64x128xf32> to vector<32x128xf32>
    %6 = tpu.concatenate %4, %5 in 1 : vector<32x128xf32>, vector<32x128xf32> -> vector<32x256xf32>
    %7 = arith.truncf %6 : vector<32x256xf32> to vector<32x256xbf16>
    %c0_3 = arith.constant 0 : index
    %c0_4 = arith.constant 0 : index
    %8 = vector.load %arg4[%c0_3, %c0_4] : memref<256x128xbf16, #tpu.memory_space<vmem>>, vector<256x128xbf16>
    %cst_5 = arith.constant dense<0.000000e+00> : vector<32x128xf32>
    %9 = tpu.matmul %7, %8, %cst_5 {dimension_numbers = #tpu.dot_dimension_numbers<[1], [0], [0], [1], [0, 0, 1, 1], [], []>} : vector<32x256xbf16>, vector<256x128xbf16>, vector<32x128xf32> -> vector<32x128xf32>
    %c0_6 = arith.constant 0 : index
    %c0_7 = arith.constant 0 : index
    %10 = vector.load %arg7[%c0_6, %c0_7] : memref<1x128xf32, #tpu.memory_space<vmem>>, vector<1x128xf32>
    %11 = vector.broadcast %10 : vector<1x128xf32> to vector<32x128xf32>
    %12 = arith.mulf %9, %11 : vector<32x128xf32>
    %c0_8 = arith.constant 0 : index
    %c0_9 = arith.constant 0 : index
    %13 = vector.load %arg9[%c0_8, %c0_9] : memref<1x128xf32, #tpu.memory_space<vmem>>, vector<1x128xf32>
    %14 = vector.broadcast %13 : vector<1x128xf32> to vector<32x128xf32>
    %15 = arith.addf %12, %14 : vector<32x128xf32>
    %cst_10 = arith.constant 0.000000e+00 : f32
    %16 = vector.broadcast %cst_10 : f32 to vector<32x128xf32>
    %17 = arith.maximumf %15, %16 : vector<32x128xf32>
    %c0_11 = arith.constant 0 : index
    %c0_12 = arith.constant 0 : index
    %18 = vector.load %arg1[%c0_11, %c0_12] : memref<16x32xf32, #tpu.memory_space<vmem>>, vector<16x32xf32>
    %19 = arith.truncf %18 : vector<16x32xf32> to vector<16x32xbf16>
    %20 = arith.truncf %17 : vector<32x128xf32> to vector<32x128xbf16>
    %cst_13 = arith.constant dense<0.000000e+00> : vector<16x128xf32>
    %21 = tpu.matmul %19, %20, %cst_13 {dimension_numbers = #tpu.dot_dimension_numbers<[1], [0], [0], [1], [0, 0, 1, 1], [], []>} : vector<16x32xbf16>, vector<32x128xbf16>, vector<16x128xf32> -> vector<16x128xf32>
    %22 = vector.extract_strided_slice %17 {offsets = [0, 0], sizes = [16, 128], strides = [1, 1]} : vector<32x128xf32> to vector<16x128xf32>
    %23 = tpu.concatenate %21, %22 in 1 : vector<16x128xf32>, vector<16x128xf32> -> vector<16x256xf32>
    %24 = arith.truncf %23 : vector<16x256xf32> to vector<16x256xbf16>
    %c0_14 = arith.constant 0 : index
    %c0_15 = arith.constant 0 : index
    %25 = vector.load %arg5[%c0_14, %c0_15] : memref<256x128xbf16, #tpu.memory_space<vmem>>, vector<256x128xbf16>
    %cst_16 = arith.constant dense<0.000000e+00> : vector<16x128xf32>
    %26 = tpu.matmul %24, %25, %cst_16 {dimension_numbers = #tpu.dot_dimension_numbers<[1], [0], [0], [1], [0, 0, 1, 1], [], []>} : vector<16x256xbf16>, vector<256x128xbf16>, vector<16x128xf32> -> vector<16x128xf32>
    %c0_17 = arith.constant 0 : index
    %c0_18 = arith.constant 0 : index
    %27 = vector.load %arg8[%c0_17, %c0_18] : memref<1x128xf32, #tpu.memory_space<vmem>>, vector<1x128xf32>
    %28 = vector.broadcast %27 : vector<1x128xf32> to vector<16x128xf32>
    %29 = arith.mulf %26, %28 : vector<16x128xf32>
    %c0_19 = arith.constant 0 : index
    %c0_20 = arith.constant 0 : index
    %30 = vector.load %arg10[%c0_19, %c0_20] : memref<1x128xf32, #tpu.memory_space<vmem>>, vector<1x128xf32>
    %31 = vector.broadcast %30 : vector<1x128xf32> to vector<16x128xf32>
    %32 = arith.addf %29, %31 : vector<16x128xf32>
    %cst_21 = arith.constant 0.000000e+00 : f32
    %33 = vector.broadcast %cst_21 : f32 to vector<16x128xf32>
    %34 = arith.maximumf %32, %33 : vector<16x128xf32>
    %c0_22 = arith.constant 0 : index
    %c0_23 = arith.constant 0 : index
    %35 = vector.load %arg2[%c0_22, %c0_23] : memref<8x16xf32, #tpu.memory_space<vmem>>, vector<8x16xf32>
    %36 = arith.truncf %35 : vector<8x16xf32> to vector<8x16xbf16>
    %37 = arith.truncf %34 : vector<16x128xf32> to vector<16x128xbf16>
    %cst_24 = arith.constant dense<0.000000e+00> : vector<8x128xf32>
    %38 = tpu.matmul %36, %37, %cst_24 {dimension_numbers = #tpu.dot_dimension_numbers<[1], [0], [0], [1], [0, 0, 1, 1], [], []>} : vector<8x16xbf16>, vector<16x128xbf16>, vector<8x128xf32> -> vector<8x128xf32>
    %39 = vector.extract_strided_slice %34 {offsets = [0, 0], sizes = [8, 128], strides = [1, 1]} : vector<16x128xf32> to vector<8x128xf32>
    %40 = tpu.concatenate %38, %39 in 1 : vector<8x128xf32>, vector<8x128xf32> -> vector<8x256xf32>
    %41 = arith.truncf %40 : vector<8x256xf32> to vector<8x256xbf16>
    %c0_25 = arith.constant 0 : index
    %c0_26 = arith.constant 0 : index
    %42 = vector.load %arg6[%c0_25, %c0_26] : memref<256x128xbf16, #tpu.memory_space<vmem>>, vector<256x128xbf16>
    %cst_27 = arith.constant dense<0.000000e+00> : vector<8x128xf32>
    %43 = tpu.matmul %41, %42, %cst_27 {dimension_numbers = #tpu.dot_dimension_numbers<[1], [0], [0], [1], [0, 0, 1, 1], [], []>} : vector<8x256xbf16>, vector<256x128xbf16>, vector<8x128xf32> -> vector<8x128xf32>
    %c0_28 = arith.constant 0 : index
    %c0_29 = arith.constant 0 : index
    %44 = vector.load %arg11[%c0_28, %c0_29] : memref<1x128xf32, #tpu.memory_space<vmem>>, vector<1x128xf32>
    %45 = vector.broadcast %44 : vector<1x128xf32> to vector<8x128xf32>
    %46 = arith.addf %43, %45 : vector<8x128xf32>
    %c0_30 = arith.constant 0 : index
    %c0_31 = arith.constant 0 : index
    %47 = vector.load %arg12[%c0_30, %c0_31] : memref<8x128xf32, #tpu.memory_space<vmem>>, vector<8x128xf32>
    tpu.vector_store %arg12[%c0_30, %c0_31], %46 {strides = array<i32>} : memref<8x128xf32, #tpu.memory_space<vmem>>, vector<8x128xf32>,
    return
  }
}

</mosaic_0001>

<llo_original>
// kernel: tpu_custom_call.1
$region0: #{tpu_custom_call.1}
  #allocation0 [shape = 'u32[]', space=smem, size = 0x4, offset = 0x4, fixed_abs, tag = 'smem constant byte address 0x4 - core index']
  #allocation1 [shape = 'u32[144,128]{1,0:T(1,128)}', space=vmem, size = 0x12000, scoped, tag = 'internal scratch']
  %s0 = inlined_call_operand.hbm [shape: f32[32,64], index: 0, kind: input, shape index: {}]
  %s1 = inlined_call_operand.hbm [shape: f32[16,32], index: 1, kind: input, shape index: {}]
  %s2 = inlined_call_operand.hbm [shape: f32[8,16], index: 2, kind: input, shape index: {}]
  %s3 = inlined_call_operand.hbm [shape: f32[64,128], index: 3, kind: input, shape index: {}]
  %s4 = inlined_call_operand.hbm [shape: bf16[256,128], index: 4, kind: input, shape index: {}]
  %s5 = inlined_call_operand.hbm [shape: bf16[256,128], index: 5, kind: input, shape index: {}]
  %s6 = inlined_call_operand.hbm [shape: bf16[256,128], index: 6, kind: input, shape index: {}]
  %s7 = inlined_call_operand.vmem [shape: f32[1,128], index: 7, kind: input, shape index: {}]
  %s8 = inlined_call_operand.vmem [shape: f32[1,128], index: 8, kind: input, shape index: {}]
  %s9 = inlined_call_operand.vmem [shape: f32[1,128], index: 9, kind: input, shape index: {}]
  %s10 = inlined_call_operand.vmem [shape: f32[1,128], index: 10, kind: input, shape index: {}]
  %s11 = inlined_call_operand.vmem [shape: f32[1,128], index: 11, kind: input, shape index: {}]
  %s12 = inlined_call_operand.hbm [shape: f32[8,128], index: 12, kind: output, shape index: {}]
  %s13 = sld [smem:[#allocation0]]
  $region86: #{tpu_custom_call.1} parent=0
    _
  %s15 = ssub.s32 1, %s13
  %s16 = scalar_select 0, %s15, %s13
  $region1: #{tpu_custom_call.1} parent=0
    #allocation2 [shape = 'u8[16384]{0}', space=vmem, size = 0x4000, scoped, tag = 'input window, operand 0, single buffered']
    #allocation3 [shape = 's32[1]{0}', space=sflag, size = 0x4, scoped, tag = 'scoped memory for tpu_custom_call.1']
    #allocation4 [shape = 's32[1]{0}', space=sflag, size = 0x4, scoped, tag = 'scoped memory for tpu_custom_call.1']
    #allocation5 [shape = 'u8[8192]{0}', space=vmem, size = 0x2000, scoped, tag = 'input window, operand 1, single buffered']
    #allocation6 [shape = 's32[1]{0}', space=sflag, size = 0x4, scoped, tag = 'scoped memory for tpu_custom_call.1']
    #allocation7 [shape = 'u8[4096]{0}', space=vmem, size = 0x1000, scoped, tag = 'input window, operand 2, single buffered']
    #allocation8 [shape = 'u8[32768]{0}', space=vmem, size = 0x8000, scoped, tag = 'input window, operand 3, single buffered']
    #allocation9 [shape = 's32[1]{0}', space=sflag, size = 0x4, scoped, tag = 'scoped memory for tpu_custom_call.1']
    #allocation10 [shape = 'u8[65536]{0}', space=vmem, size = 0x10000, scoped, tag = 'input window, operand 4, single buffered']
    #allocation11 [shape = 'u8[65536]{0}', space=vmem, size = 0x10000, scoped, tag = 'input window, operand 5, single buffered']
    #allocation12 [shape = 's32[1]{0}', space=sflag, size = 0x4, scoped, tag = 'scoped memory for tpu_custom_call.1']
    #allocation13 [shape = 'u8[65536]{0}', space=vmem, size = 0x10000, scoped, tag = 'input window, operand 6, single buffered']
    #allocation14 [shape = 'u8[4096]{0}', space=vmem, size = 0x1000, scoped, tag = 'output window, operand 0, single buffered']
    %17 = vsyncpa [#allocation3], 0
    %18 = vsyncpa [#allocation6], 0
    %19 = vsyncpa [#allocation9], 0
    %20 = vsyncpa [#allocation12], 0
    %21 = vsyncpa [#allocation4], 0
    // Predicated region
    $region2: #{tpu_custom_call.1} parent=1 // pred_check
      _
    $region3: #{tpu_custom_call.1} parent=1 // pred_check_branch
      %23 = sbr.rel (0) target = $region5
    $region4: #{tpu_custom_call.1} parent=1 // pred_region
      %s25 = ssub.s32 512, 512
      %26 = vsyncadd [#allocation3], %s25
      %s27 = sshll.u32 [#allocation2], 4
      %s28 = int_to_ptr.vmem [resolvable:$true] %s27
      %33 = dma.hbm_to_vmem [thread:$0]  %s0, 512, %s28, [#allocation3], 128, 128, 8
    $region5: #{tpu_custom_call.1} parent=1 // pred_fallthru
      _
    // Predicated region
    $region6: #{tpu_custom_call.1} parent=1 // pred_check
      _
    $region7: #{tpu_custom_call.1} parent=1 // pred_check_branch
      %35 = sbr.rel (0) target = $region9
    $region8: #{tpu_custom_call.1} parent=1 // pred_region
      %s37 = ssub.s32 256, 256
      %38 = vsyncadd [#allocation6], %s37
      %s39 = sshll.u32 [#allocation5], 4
      %s40 = int_to_ptr.vmem [resolvable:$true] %s39
      %45 = dma.hbm_to_vmem [thread:$0]  %s1, 256, %s40, [#allocation6], 128, 128, 8
    $region9: #{tpu_custom_call.1} parent=1 // pred_fallthru
      _
    // Predicated region
    $region10: #{tpu_custom_call.1} parent=1 // pred_check
      _
    $region11: #{tpu_custom_call.1} parent=1 // pred_check_branch
      %47 = sbr.rel (0) target = $region13
    $region12: #{tpu_custom_call.1} parent=1 // pred_region
      %s49 = ssub.s32 128, 128
      %50 = vsyncadd [#allocation6], %s49
      %s52 = sshll.u32 [#allocation7], 4
      %s53 = int_to_ptr.vmem [resolvable:$true] %s52
      %55 = dma.hbm_to_vmem [thread:$0]  %s2, 128, %s53, [#allocation6]
    $region13: #{tpu_custom_call.1} parent=1 // pred_fallthru
      _
    // Predicated region
    $region14: #{tpu_custom_call.1} parent=1 // pred_check
      _
    $region15: #{tpu_custom_call.1} parent=1 // pred_check_branch
      %57 = sbr.rel (0) target = $region17
    $region16: #{tpu_custom_call.1} parent=1 // pred_region
      %s59 = ssub.s32 1024, 1024
      %60 = vsyncadd [#allocation9], %s59
      %s61 = sshll.u32 [#allocation8], 4
      %s62 = int_to_ptr.vmem [resolvable:$true] %s61
      %67 = dma.hbm_to_vmem [thread:$0]  %s3, 1024, %s62, [#allocation9], 128, 128, 8
    $region17: #{tpu_custom_call.1} parent=1 // pred_fallthru
      _
    // Predicated region
    $region18: #{tpu_custom_call.1} parent=1 // pred_check
      _
    $region19: #{tpu_custom_call.1} parent=1 // pred_check_branch
      %69 = sbr.rel (0) target = $region21
    $region20: #{tpu_custom_call.1} parent=1 // pred_region
      %s71 = ssub.s32 2048, 2048
      %72 = vsyncadd [#allocation9], %s71
      %s73 = sshll.u32 [#allocation10], 4
      %s74 = int_to_ptr.vmem [resolvable:$true] %s73
      %79 = dma.hbm_to_vmem [thread:$0]  %s4, 2048, %s74, [#allocation9], 64, 64, 4
    $region21: #{tpu_custom_call.1} parent=1 // pred_fallthru
      _
    // Predicated region
    $region22: #{tpu_custom_call.1} parent=1 // pred_check
      _
    $region23: #{tpu_custom_call.1} parent=1 // pred_check_branch
      %81 = sbr.rel (0) target = $region25
    $region24: #{tpu_custom_call.1} parent=1 // pred_region
      %s83 = ssub.s32 2048, 2048
      %84 = vsyncadd [#allocation12], %s83
      %s85 = sshll.u32 [#allocation11], 4
      %s86 = int_to_ptr.vmem [resolvable:$true] %s85
      %91 = dma.hbm_to_vmem [thread:$0]  %s5, 2048, %s86, [#allocation12], 64, 64, 4
    $region25: #{tpu_custom_call.1} parent=1 // pred_fallthru
      _
    // Predicated region
    $region26: #{tpu_custom_call.1} parent=1 // pred_check
      _
    $region27: #{tpu_custom_call.1} parent=1 // pred_check_branch
      %93 = sbr.rel (0) target = $region29
    $region28: #{tpu_custom_call.1} parent=1 // pred_region
      %s95 = ssub.s32 2048, 2048
      %96 = vsyncadd [#allocation12], %s95
      %s97 = sshll.u32 [#allocation13], 4
      %s98 = int_to_ptr.vmem [resolvable:$true] %s97
      %103 = dma.hbm_to_vmem [thread:$0]  %s6, 2048, %s98, [#allocation12], 64, 64, 4
    $region29: #{tpu_custom_call.1} parent=1 // pred_fallthru
      _
    // Predicated region
    $region30: #{tpu_custom_call.1} parent=1 // pred_check
      _
    $region31: #{tpu_custom_call.1} parent=1 // pred_check_branch
      %105 = sbr.rel (0) target = $region33
    $region32: #{tpu_custom_call.1} parent=1 // pred_region
      _
    $region33: #{tpu_custom_call.1} parent=1 // pred_fallthru
      _
    // Predicated region
    $region34: #{tpu_custom_call.1} parent=1 // pred_check
      _
    $region35: #{tpu_custom_call.1} parent=1 // pred_check_branch
      %107 = sbr.rel (0) target = $region37
    $region36: #{tpu_custom_call.1} parent=1 // pred_region
      _
    $region37: #{tpu_custom_call.1} parent=1 // pred_fallthru
      _
    // Predicated region
    $region38: #{tpu_custom_call.1} parent=1 // pred_check
      _
    $region39: #{tpu_custom_call.1} parent=1 // pred_check_branch
      %109 = sbr.rel (0) target = $region41
    $region40: #{tpu_custom_call.1} parent=1 // pred_region
      _
    $region41: #{tpu_custom_call.1} parent=1 // pred_fallthru
      _
    // Predicated region
    $region42: #{tpu_custom_call.1} parent=1 // pred_check
      _
    $region43: #{tpu_custom_call.1} parent=1 // pred_check_branch
      %111 = sbr.rel (0) target = $region45
    $region44: #{tpu_custom_call.1} parent=1 // pred_region
      _
    $region45: #{tpu_custom_call.1} parent=1 // pred_fallthru
      _
    // Predicated region
    $region46: #{tpu_custom_call.1} parent=1 // pred_check
      _
    $region47: #{tpu_custom_call.1} parent=1 // pred_check_branch
      %113 = sbr.rel (0) target = $region49
    $region48: #{tpu_custom_call.1} parent=1 // pred_region
      _
    $region49: #{tpu_custom_call.1} parent=1 // pred_fallthru
      _
    // Predicated region
    $region50: #{tpu_custom_call.1} parent=1 // pred_check
      _
    $region51: #{tpu_custom_call.1} parent=1 // pred_check_branch
      %115 = sbr.rel (0) target = $region53
    $region52: #{tpu_custom_call.1} parent=1 // pred_region
      %116 = dma.done [#allocation3], 512
    $region53: #{tpu_custom_call.1} parent=1 // pred_fallthru
      _
    // Predicated region
    $region54: #{tpu_custom_call.1} parent=1 // pred_check
      _
    $region55: #{tpu_custom_call.1} parent=1 // pred_check_branch
      %118 = sbr.rel (0) target = $region57
    $region56: #{tpu_custom_call.1} parent=1 // pred_region
      %119 = dma.done [#allocation6], 256
    $region57: #{tpu_custom_call.1} parent=1 // pred_fallthru
      _
    // Predicated region
    $region58: #{tpu_custom_call.1} parent=1 // pred_check
      _
    $region59: #{tpu_custom_call.1} parent=1 // pred_check_branch
      %121 = sbr.rel (0) target = $region61
    $region60: #{tpu_custom_call.1} parent=1 // pred_region
      %122 = dma.done [#allocation6], 128
    $region61: #{tpu_custom_call.1} parent=1 // pred_fallthru
      _
    // Predicated region
    $region62: #{tpu_custom_call.1} parent=1 // pred_check
      _
    $region63: #{tpu_custom_call.1} parent=1 // pred_check_branch
      %124 = sbr.rel (0) target = $region65
    $region64: #{tpu_custom_call.1} parent=1 // pred_region
      %125 = dma.done [#allocation9], 1024
    $region65: #{tpu_custom_call.1} parent=1 // pred_fallthru
      _
    // Predicated region
    $region66: #{tpu_custom_call.1} parent=1 // pred_check
      _
    $region67: #{tpu_custom_call.1} parent=1 // pred_check_branch
      %127 = sbr.rel (0) target = $region69
    $region68: #{tpu_custom_call.1} parent=1 // pred_region
      %128 = dma.done [#allocation9], 2048
    $region69: #{tpu_custom_call.1} parent=1 // pred_fallthru
      _
    // Predicated region
    $region70: #{tpu_custom_call.1} parent=1 // pred_check
      _
    $region71: #{tpu_custom_call.1} parent=1 // pred_check_branch
      %130 = sbr.rel (0) target = $region73
    $region72: #{tpu_custom_call.1} parent=1 // pred_region
      %131 = dma.done [#allocation12], 2048
    $region73: #{tpu_custom_call.1} parent=1 // pred_fallthru
      _
    // Predicated region
    $region74: #{tpu_custom_call.1} parent=1 // pred_check
      _
    $region75: #{tpu_custom_call.1} parent=1 // pred_check_branch
      %133 = sbr.rel (0) target = $region77
    $region76: #{tpu_custom_call.1} parent=1 // pred_region
      %134 = dma.done [#allocation12], 2048
    $region77: #{tpu_custom_call.1} parent=1 // pred_fallthru
      _
    %v136 = vld [vmem:[#allocation8] sm:$0xff]
    %v137 = vld [vmem:[#allocation8 + $0x8] sm:$0xff]
    %v138 = vld [vmem:[#allocation8 + $0x10] sm:$0xff]
    %v139 = vld [vmem:[#allocation8 + $0x18] sm:$0xff]
    %v140 = vld [vmem:[#allocation8 + $0x20] sm:$0xff]
    %v141 = vld [vmem:[#allocation8 + $0x28] sm:$0xff]
    %v142 = vld [vmem:[#allocation8 + $0x30] sm:$0xff]
    %v143 = vld [vmem:[#allocation8 + $0x38] sm:$0xff]
    %v144 = vld [vmem:[#allocation2] sm:$0xff]
    %v145 = vld [vmem:[#allocation2 + $0x8] sm:$0xff]
    %v146 = vld [vmem:[#allocation2 + $0x10] sm:$0xff]
    %v147 = vld [vmem:[#allocation2 + $0x18] sm:$0xff]
    %v148 = vpack.c.bf16 %v145, %v144
    %v149 = vpack.c.bf16 %v147, %v146
    %v150 = vpack.c.bf16 %v137, %v136
    %v151 = vpack.c.bf16 %v139, %v138
    %v152 = vpack.c.bf16 %v141, %v140
    %v153 = vpack.c.bf16 %v143, %v142
    %vm154 = vcmask 523264
    %v156 = vsel %vm154, %v148, 0
    %v159 = vsel %vm154, %v149, 0
    %161 = vmatprep.subr.bf16.mxu0 0
    %162 = vmatpush1.bf16.msra.mxu0 0
    %163 = vmatprep.subr.bf16.mxu0 0
    %164 = vmatpush1.bf16.msra.mxu0 0
    %165 = vmatprep.subr.bf16.mxu0 0
    %166 = vmatpush1.bf16.msra.mxu0 0
    %167 = vmatprep.subr.bf16.mxu0 0
    %168 = vmatpush1.bf16.msra.mxu0 0
    %169 = vmatprep.subr.bf16.mxu0 0
    %170 = vmatpush1.bf16.msra.mxu0 %v153
    %171 = vmatprep.subr.bf16.mxu0 0
    %172 = vmatpush1.bf16.msra.mxu0 %v152
    %173 = vmatprep.subr.bf16.mxu0 0
    %174 = vmatpush1.bf16.msra.mxu0 %v151
    %175 = vmatprep.subr.bf16.mxu0 0
    %176 = vmatpush1.bf16.msra.mxu0 %v150
    %177 = vmatprep.subr.bf16.mxu0 0
    %178 = vmatpush2.bf16.msra.mxu0 0
    %179 = vmatprep.subr.bf16.mxu0 0
    %180 = vmatpush2.bf16.msra.mxu0 0
    %181 = vmatprep.subr.bf16.mxu0 0
    %182 = vmatpush2.bf16.msra.mxu0 0
    %183 = vmatprep.subr.bf16.mxu0 0
    %184 = vmatpush2.bf16.msra.mxu0 0
    %185 = vmatprep.subr.bf16.mxu0 0
    %186 = vmatpush2.bf16.msra.mxu0 0
    %187 = vmatprep.subr.bf16.mxu0 0
    %188 = vmatpush2.bf16.msra.mxu0 0
    %189 = vmatprep.subr.bf16.mxu0 0
    %190 = vmatpush2.bf16.msra.mxu0 0
    %191 = vmatprep.subr.bf16.mxu0 0
    %192 = vmatpush2.bf16.msra.mxu0 0
    %193 = vmatprep.mubr.bf16.mxu0 0
    %194 = vmatmul.mubr.bf16.gmra.mxu0 %v156
    %v195 = vpop.f32.mrf.mxu0
    %v196 = vadd.f32 0.0, %v195
    %v197 = vpop.f32.mrf.mxu0
    %v198 = vpop.f32.mrf.mxu0
    %v199 = vadd.f32 0.0, %v198
    %v200 = vpop.f32.mrf.mxu0
    %201 = vmatprep.mubr.bf16.mxu0 0
    %202 = vmatmul.mubr.bf16.gmra.mxu0 %v159
    %v203 = vpop.f32.mrf.mxu0
    %v204 = vadd.f32 0.0, %v203
    %v205 = vpop.f32.mrf.mxu0
    %v206 = vpop.f32.mrf.mxu0
    %v207 = vadd.f32 0.0, %v206
    %v208 = vpop.f32.mrf.mxu0
    %209 = vdwg.mxu0
    %v210 = vpack.c.bf16 %v199, %v196
    %v211 = vpack.c.bf16 %v207, %v204
    %v212 = vld [vmem:[#allocation10] sm:$0xf]
    %v213 = vld [vmem:[#allocation10 + $0x4] sm:$0xf]
    %v214 = vld [vmem:[#allocation10 + $0x8] sm:$0xf]
    %v215 = vld [vmem:[#allocation10 + $0xc] sm:$0xf]
    %v216 = vld [vmem:[#allocation10 + $0x10] sm:$0xf]
    %v217 = vld [vmem:[#allocation10 + $0x14] sm:$0xf]
    %v218 = vld [vmem:[#allocation10 + $0x18] sm:$0xf]
    %v219 = vld [vmem:[#allocation10 + $0x1c] sm:$0xf]
    %v220 = vld [vmem:[#allocation10 + $0x20] sm:$0xf]
    %v221 = vld [vmem:[#allocation10 + $0x24] sm:$0xf]
    %v222 = vld [vmem:[#allocation10 + $0x28] sm:$0xf]
    %v223 = vld [vmem:[#allocation10 + $0x2c] sm:$0xf]
    %v224 = vld [vmem:[#allocation10 + $0x30] sm:$0xf]
    %v225 = vld [vmem:[#allocation10 + $0x34] sm:$0xf]
    %v226 = vld [vmem:[#allocation10 + $0x38] sm:$0xf]
    %v227 = vld [vmem:[#allocation10 + $0x3c] sm:$0xf]
    %v228 = vld [vmem:[#allocation10 + $0x40] sm:$0xf]
    %v229 = vld [vmem:[#allocation10 + $0x44] sm:$0xf]
    %v230 = vld [vmem:[#allocation10 + $0x48] sm:$0xf]
    %v231 = vld [vmem:[#allocation10 + $0x4c] sm:$0xf]
    %v232 = vld [vmem:[#allocation10 + $0x50] sm:$0xf]
    %v233 = vld [vmem:[#allocation10 + $0x54] sm:$0xf]
    %v234 = vld [vmem:[#allocation10 + $0x58] sm:$0xf]
    %v235 = vld [vmem:[#allocation10 + $0x5c] sm:$0xf]
    %v236 = vld [vmem:[#allocation10 + $0x60] sm:$0xf]
    %v237 = vld [vmem:[#allocation10 + $0x64] sm:$0xf]
    %v238 = vld [vmem:[#allocation10 + $0x68] sm:$0xf]
    %v239 = vld [vmem:[#allocation10 + $0x6c] sm:$0xf]
    %v240 = vld [vmem:[#allocation10 + $0x70] sm:$0xf]
    %v241 = vld [vmem:[#allocation10 + $0x74] sm:$0xf]
    %v242 = vld [vmem:[#allocation10 + $0x78] sm:$0xf]
    %v243 = vld [vmem:[#allocation10 + $0x7c] sm:$0xf]
    %v276 = vunpack.c.l.b16 %v212
    %v277 = vunpack.c.l.b16 %v213
    %v278 = vunpack.c.l.b16 %v214
    %v279 = vunpack.c.l.b16 %v215
    %v280 = vunpack.c.l.b16 %v216
    %v281 = vunpack.c.l.b16 %v217
    %v282 = vunpack.c.l.b16 %v218
    %v283 = vunpack.c.l.b16 %v219
    %v284 = vunpack.c.l.b16 %v220
    %v285 = vunpack.c.l.b16 %v221
    %v286 = vunpack.c.l.b16 %v222
    %v287 = vunpack.c.l.b16 %v223
    %v288 = vunpack.c.l.b16 %v224
    %v289 = vunpack.c.l.b16 %v225
    %v290 = vunpack.c.l.b16 %v226
    %v291 = vunpack.c.l.b16 %v227
    %v292 = vunpack.c.l.b16 %v228
    %v293 = vunpack.c.l.b16 %v229
    %v294 = vunpack.c.l.b16 %v230
    %v295 = vunpack.c.l.b16 %v231
    %v296 = vunpack.c.l.b16 %v232
    %v297 = vunpack.c.l.b16 %v233
    %v298 = vunpack.c.l.b16 %v234
    %v299 = vunpack.c.l.b16 %v235
    %v300 = vunpack.c.l.b16 %v236
    %v301 = vunpack.c.l.b16 %v237
    %v302 = vunpack.c.l.b16 %v238
    %v303 = vunpack.c.l.b16 %v239
    %v304 = vunpack.c.l.b16 %v240
    %v305 = vunpack.c.l.b16 %v241
    %v306 = vunpack.c.l.b16 %v242
    %v307 = vunpack.c.l.b16 %v243
    %v308 = vpack.c.b16 %v277, %v276
    %v309 = vpack.c.b16 %v279, %v278
    %v310 = vpack.c.b16 %v281, %v280
    %v311 = vpack.c.b16 %v283, %v282
    %v312 = vpack.c.b16 %v285, %v284
    %v313 = vpack.c.b16 %v287, %v286
    %v314 = vpack.c.b16 %v289, %v288
    %v315 = vpack.c.b16 %v291, %v290
    %v316 = vpack.c.b16 %v293, %v292
    %v317 = vpack.c.b16 %v295, %v294
    %v318 = vpack.c.b16 %v297, %v296
    %v319 = vpack.c.b16 %v299, %v298
    %v320 = vpack.c.b16 %v301, %v300
    %v321 = vpack.c.b16 %v303, %v302
    %v322 = vpack.c.b16 %v305, %v304
    %v323 = vpack.c.b16 %v307, %v306
    %340 = vmatprep.subr.bf16.mxu0 0
    %341 = vmatpush1.bf16.msra.mxu0 %v315
    %342 = vmatprep.subr.bf16.mxu0 0
    %343 = vmatpush1.bf16.msra.mxu0 %v314
    %344 = vmatprep.subr.bf16.mxu0 0
    %345 = vmatpush1.bf16.msra.mxu0 %v313
    %346 = vmatprep.subr.bf16.mxu0 0
    %347 = vmatpush1.bf16.msra.mxu0 %v312
    %348 = vmatprep.subr.bf16.mxu0 0
    %349 = vmatpush1.bf16.msra.mxu0 %v311
    %350 = vmatprep.subr.bf16.mxu0 0
    %351 = vmatpush1.bf16.msra.mxu0 %v310
    %352 = vmatprep.subr.bf16.mxu0 0
    %353 = vmatpush1.bf16.msra.mxu0 %v309
    %354 = vmatprep.subr.bf16.mxu0 0
    %355 = vmatpush1.bf16.msra.mxu0 %v308
    %356 = vmatprep.subr.bf16.mxu0 0
    %357 = vmatpush2.bf16.msra.mxu0 %v323
    %358 = vmatprep.subr.bf16.mxu0 0
    %359 = vmatpush2.bf16.msra.mxu0 %v322
    %360 = vmatprep.subr.bf16.mxu0 0
    %361 = vmatpush2.bf16.msra.mxu0 %v321
    %362 = vmatprep.subr.bf16.mxu0 0
    %363 = vmatpush2.bf16.msra.mxu0 %v320
    %364 = vmatprep.subr.bf16.mxu0 0
    %365 = vmatpush2.bf16.msra.mxu0 %v319
    %366 = vmatprep.subr.bf16.mxu0 0
    %367 = vmatpush2.bf16.msra.mxu0 %v318
    %368 = vmatprep.subr.bf16.mxu0 0
    %369 = vmatpush2.bf16.msra.mxu0 %v317
    %370 = vmatprep.subr.bf16.mxu0 0
    %371 = vmatpush2.bf16.msra.mxu0 %v316
    %372 = vmatprep.mubr.bf16.mxu0 %v150
    %373 = vmatmul.mubr.bf16.gmra.mxu0 %v210
    %v374 = vpop.f32.mrf.mxu0
    %v375 = vadd.f32 0.0, %v374
    %v376 = vpop.f32.mrf.mxu0
    %v377 = vpop.f32.mrf.mxu0
    %v378 = vadd.f32 0.0, %v377
    %v379 = vpop.f32.mrf.mxu0
    %380 = vmatprep.mubr.bf16.mxu0 %v151
    %381 = vmatmul.mubr.bf16.gmra.mxu0 %v211
    %v382 = vpop.f32.mrf.mxu0
    %v383 = vadd.f32 0.0, %v382
    %v384 = vpop.f32.mrf.mxu0
    %v385 = vpop.f32.mrf.mxu0
    %v386 = vadd.f32 0.0, %v385
    %v387 = vpop.f32.mrf.mxu0
    %388 = vdwg.mxu0
    %v389 = vld [vmem:[%s7] sm:$0x1]
    %v391 = vlaneseq
    %v392 = vshrl.u32 %v391, 7
    %v393 = vsub.s32 0, %v392
    %v394 = vrot.slane %v389, %v393
    %v396 = vmul.f32 %v375, %v394
    %v397 = vmul.f32 %v378, %v394
    %v398 = vmul.f32 %v383, %v394
    %v399 = vmul.f32 %v386, %v394
    %v400 = vld [vmem:[%s9] sm:$0x1]
    %v402 = vlaneseq
    %v403 = vshrl.u32 %v402, 7
    %v404 = vsub.s32 0, %v403
    %v405 = vrot.slane %v400, %v404
    %v407 = vadd.f32 %v396, %v405
    %v408 = vadd.f32 %v397, %v405
    %v409 = vadd.f32 %v398, %v405
    %v410 = vadd.f32 %v399, %v405
    %v411 = vmax.f32 %v407, 0.0
    %v412 = vmax.f32 %v408, 0.0
    %v413 = vmax.f32 %v409, 0.0
    %v414 = vmax.f32 %v410, 0.0
    %v415 = vld [vmem:[#allocation5] sm:$0xff]
    %v416 = vld [vmem:[#allocation5 + $0x8] sm:$0xff]
    %v417 = vpack.c.bf16 %v416, %v415
    %v418 = vpack.c.bf16 %v412, %v411
    %v419 = vpack.c.bf16 %v414, %v413
    %vm420 = vcmask 261120
    %v422 = vsel %vm420, %v417, 0
    %424 = vmatprep.subr.bf16.mxu0 0
    %425 = vmatpush1.bf16.msra.mxu0 0
    %426 = vmatprep.subr.bf16.mxu0 0
    %427 = vmatpush1.bf16.msra.mxu0 0
    %428 = vmatprep.subr.bf16.mxu0 0
    %429 = vmatpush1.bf16.msra.mxu0 0
    %430 = vmatprep.subr.bf16.mxu0 0
    %431 = vmatpush1.bf16.msra.mxu0 0
    %432 = vmatprep.subr.bf16.mxu0 0
    %433 = vmatpush1.bf16.msra.mxu0 0
    %434 = vmatprep.subr.bf16.mxu0 0
    %435 = vmatpush1.bf16.msra.mxu0 0
    %436 = vmatprep.subr.bf16.mxu0 0
    %437 = vmatpush1.bf16.msra.mxu0 %v419
    %438 = vmatprep.subr.bf16.mxu0 0
    %439 = vmatpush1.bf16.msra.mxu0 %v418
    %440 = vmatprep.subr.bf16.mxu0 0
    %441 = vmatpush2.bf16.msra.mxu0 0
    %442 = vmatprep.subr.bf16.mxu0 0
    %443 = vmatpush2.bf16.msra.mxu0 0
    %444 = vmatprep.subr.bf16.mxu0 0
    %445 = vmatpush2.bf16.msra.mxu0 0
    %446 = vmatprep.subr.bf16.mxu0 0
    %447 = vmatpush2.bf16.msra.mxu0 0
    %448 = vmatprep.subr.bf16.mxu0 0
    %449 = vmatpush2.bf16.msra.mxu0 0
    %450 = vmatprep.subr.bf16.mxu0 0
    %451 = vmatpush2.bf16.msra.mxu0 0
    %452 = vmatprep.subr.bf16.mxu0 0
    %453 = vmatpush2.bf16.msra.mxu0 0
    %454 = vmatprep.subr.bf16.mxu0 0
    %455 = vmatpush2.bf16.msra.mxu0 0
    %456 = vmatprep.mubr.bf16.mxu0 0
    %457 = vmatmul.mubr.bf16.gmra.mxu0 %v422
    %v458 = vpop.f32.mrf.mxu0
    %v459 = vadd.f32 0.0, %v458
    %v460 = vpop.f32.mrf.mxu0
    %v461 = vpop.f32.mrf.mxu0
    %v462 = vadd.f32 0.0, %v461
    %v463 = vpop.f32.mrf.mxu0
    %464 = vdwg.mxu0
    %v465 = vpack.c.bf16 %v462, %v459
    %v466 = vld [vmem:[#allocation11] sm:$0xf]
    %v467 = vld [vmem:[#allocation11 + $0x4] sm:$0xf]
    %v468 = vld [vmem:[#allocation11 + $0x8] sm:$0xf]
    %v469 = vld [vmem:[#allocation11 + $0xc] sm:$0xf]
    %v470 = vld [vmem:[#allocation11 + $0x10] sm:$0xf]
    %v471 = vld [vmem:[#allocation11 + $0x14] sm:$0xf]
    %v472 = vld [vmem:[#allocation11 + $0x18] sm:$0xf]
    %v473 = vld [vmem:[#allocation11 + $0x1c] sm:$0xf]
    %v474 = vld [vmem:[#allocation11 + $0x20] sm:$0xf]
    %v475 = vld [vmem:[#allocation11 + $0x24] sm:$0xf]
    %v476 = vld [vmem:[#allocation11 + $0x28] sm:$0xf]
    %v477 = vld [vmem:[#allocation11 + $0x2c] sm:$0xf]
    %v478 = vld [vmem:[#allocation11 + $0x30] sm:$0xf]
    %v479 = vld [vmem:[#allocation11 + $0x34] sm:$0xf]
    %v480 = vld [vmem:[#allocation11 + $0x38] sm:$0xf]
    %v481 = vld [vmem:[#allocation11 + $0x3c] sm:$0xf]
    %v482 = vld [vmem:[#allocation11 + $0x40] sm:$0xf]
    %v483 = vld [vmem:[#allocation11 + $0x44] sm:$0xf]
    %v484 = vld [vmem:[#allocation11 + $0x48] sm:$0xf]
    %v485 = vld [vmem:[#allocation11 + $0x4c] sm:$0xf]
    %v486 = vld [vmem:[#allocation11 + $0x50] sm:$0xf]
    %v487 = vld [vmem:[#allocation11 + $0x54] sm:$0xf]
    %v488 = vld [vmem:[#allocation11 + $0x58] sm:$0xf]
    %v489 = vld [vmem:[#allocation11 + $0x5c] sm:$0xf]
    %v490 = vld [vmem:[#allocation11 + $0x60] sm:$0xf]
    %v491 = vld [vmem:[#allocation11 + $0x64] sm:$0xf]
    %v492 = vld [vmem:[#allocation11 + $0x68] sm:$0xf]
    %v493 = vld [vmem:[#allocation11 + $0x6c] sm:$0xf]
    %v494 = vld [vmem:[#allocation11 + $0x70] sm:$0xf]
    %v495 = vld [vmem:[#allocation11 + $0x74] sm:$0xf]
    %v496 = vld [vmem:[#allocation11 + $0x78] sm:$0xf]
    %v497 = vld [vmem:[#allocation11 + $0x7c] sm:$0xf]
    %v530 = vunpack.c.l.b16 %v466
    %v531 = vunpack.c.l.b16 %v467
    %v532 = vunpack.c.l.b16 %v468
    %v533 = vunpack.c.l.b16 %v469
    %v534 = vunpack.c.l.b16 %v470
    %v535 = vunpack.c.l.b16 %v471
    %v536 = vunpack.c.l.b16 %v472
    %v537 = vunpack.c.l.b16 %v473
    %v538 = vunpack.c.l.b16 %v474
    %v539 = vunpack.c.l.b16 %v475
    %v540 = vunpack.c.l.b16 %v476
    %v541 = vunpack.c.l.b16 %v477
    %v542 = vunpack.c.l.b16 %v478
    %v543 = vunpack.c.l.b16 %v479
    %v544 = vunpack.c.l.b16 %v480
    %v545 = vunpack.c.l.b16 %v481
    %v546 = vunpack.c.l.b16 %v482
    %v547 = vunpack.c.l.b16 %v483
    %v548 = vunpack.c.l.b16 %v484
    %v549 = vunpack.c.l.b16 %v485
    %v550 = vunpack.c.l.b16 %v486
    %v551 = vunpack.c.l.b16 %v487
    %v552 = vunpack.c.l.b16 %v488
    %v553 = vunpack.c.l.b16 %v489
    %v554 = vunpack.c.l.b16 %v490
    %v555 = vunpack.c.l.b16 %v491
    %v556 = vunpack.c.l.b16 %v492
    %v557 = vunpack.c.l.b16 %v493
    %v558 = vunpack.c.l.b16 %v494
    %v559 = vunpack.c.l.b16 %v495
    %v560 = vunpack.c.l.b16 %v496
    %v561 = vunpack.c.l.b16 %v497
    %v562 = vpack.c.b16 %v531, %v530
    %v563 = vpack.c.b16 %v533, %v532
    %v564 = vpack.c.b16 %v535, %v534
    %v565 = vpack.c.b16 %v537, %v536
    %v566 = vpack.c.b16 %v539, %v538
    %v567 = vpack.c.b16 %v541, %v540
    %v568 = vpack.c.b16 %v543, %v542
    %v569 = vpack.c.b16 %v545, %v544
    %v570 = vpack.c.b16 %v547, %v546
    %v571 = vpack.c.b16 %v549, %v548
    %v572 = vpack.c.b16 %v551, %v550
    %v573 = vpack.c.b16 %v553, %v552
    %v574 = vpack.c.b16 %v555, %v554
    %v575 = vpack.c.b16 %v557, %v556
    %v576 = vpack.c.b16 %v559, %v558
    %v577 = vpack.c.b16 %v561, %v560
    %594 = vmatprep.subr.bf16.mxu0 0
    %595 = vmatpush1.bf16.msra.mxu0 %v569
    %596 = vmatprep.subr.bf16.mxu0 0
    %597 = vmatpush1.bf16.msra.mxu0 %v568
    %598 = vmatprep.subr.bf16.mxu0 0
    %599 = vmatpush1.bf16.msra.mxu0 %v567
    %600 = vmatprep.subr.bf16.mxu0 0
    %601 = vmatpush1.bf16.msra.mxu0 %v566
    %602 = vmatprep.subr.bf16.mxu0 0
    %603 = vmatpush1.bf16.msra.mxu0 %v565
    %604 = vmatprep.subr.bf16.mxu0 0
    %605 = vmatpush1.bf16.msra.mxu0 %v564
    %606 = vmatprep.subr.bf16.mxu0 0
    %607 = vmatpush1.bf16.msra.mxu0 %v563
    %608 = vmatprep.subr.bf16.mxu0 0
    %609 = vmatpush1.bf16.msra.mxu0 %v562
    %610 = vmatprep.subr.bf16.mxu0 0
    %611 = vmatpush2.bf16.msra.mxu0 %v577
    %612 = vmatprep.subr.bf16.mxu0 0
    %613 = vmatpush2.bf16.msra.mxu0 %v576
    %614 = vmatprep.subr.bf16.mxu0 0
    %615 = vmatpush2.bf16.msra.mxu0 %v575
    %616 = vmatprep.subr.bf16.mxu0 0
    %617 = vmatpush2.bf16.msra.mxu0 %v574
    %618 = vmatprep.subr.bf16.mxu0 0
    %619 = vmatpush2.bf16.msra.mxu0 %v573
    %620 = vmatprep.subr.bf16.mxu0 0
    %621 = vmatpush2.bf16.msra.mxu0 %v572
    %622 = vmatprep.subr.bf16.mxu0 0
    %623 = vmatpush2.bf16.msra.mxu0 %v571
    %624 = vmatprep.subr.bf16.mxu0 0
    %625 = vmatpush2.bf16.msra.mxu0 %v570
    %626 = vmatprep.mubr.bf16.mxu0 %v418
    %627 = vmatmul.mubr.bf16.gmra.mxu0 %v465
    %v628 = vpop.f32.mrf.mxu0
    %v629 = vadd.f32 0.0, %v628
    %v630 = vpop.f32.mrf.mxu0
    %v631 = vpop.f32.mrf.mxu0
    %v632 = vadd.f32 0.0, %v631
    %v633 = vpop.f32.mrf.mxu0
    %634 = vdwg.mxu0
    %v635 = vld [vmem:[%s8] sm:$0x1]
    %v637 = vlaneseq
    %v638 = vshrl.u32 %v637, 7
    %v639 = vsub.s32 0, %v638
    %v640 = vrot.slane %v635, %v639
    %v642 = vmul.f32 %v629, %v640
    %v643 = vmul.f32 %v632, %v640
    %v644 = vld [vmem:[%s10] sm:$0x1]
    %v646 = vlaneseq
    %v647 = vshrl.u32 %v646, 7
    %v648 = vsub.s32 0, %v647
    %v649 = vrot.slane %v644, %v648
    %v651 = vadd.f32 %v642, %v649
    %v652 = vadd.f32 %v643, %v649
    %v653 = vmax.f32 %v651, 0.0
    %v654 = vmax.f32 %v652, 0.0
    %v655 = vld [vmem:[#allocation7] sm:$0xff]
    %v656 = vpack.c.bf16 %v655, %v655
    %v657 = vpack.c.bf16 %v654, %v653
    %vm658 = vcmask 130048
    %v660 = vsel %vm658, %v656, 0
    %662 = vmatprep.subr.bf16.mxu0 0
    %663 = vmatpush1.bf16.msra.mxu0 0
    %664 = vmatprep.subr.bf16.mxu0 0
    %665 = vmatpush1.bf16.msra.mxu0 0
    %666 = vmatprep.subr.bf16.mxu0 0
    %667 = vmatpush1.bf16.msra.mxu0 0
    %668 = vmatprep.subr.bf16.mxu0 0
    %669 = vmatpush1.bf16.msra.mxu0 0
    %670 = vmatprep.subr.bf16.mxu0 0
    %671 = vmatpush1.bf16.msra.mxu0 0
    %672 = vmatprep.subr.bf16.mxu0 0
    %673 = vmatpush1.bf16.msra.mxu0 0
    %674 = vmatprep.subr.bf16.mxu0 0
    %675 = vmatpush1.bf16.msra.mxu0 0
    %676 = vmatprep.subr.bf16.mxu0 0
    %677 = vmatpush1.bf16.msra.mxu0 %v657
    %678 = vmatprep.subr.bf16.mxu0 0
    %679 = vmatpush2.bf16.msra.mxu0 0
    %680 = vmatprep.subr.bf16.mxu0 0
    %681 = vmatpush2.bf16.msra.mxu0 0
    %682 = vmatprep.subr.bf16.mxu0 0
    %683 = vmatpush2.bf16.msra.mxu0 0
    %684 = vmatprep.subr.bf16.mxu0 0
    %685 = vmatpush2.bf16.msra.mxu0 0
    %686 = vmatprep.subr.bf16.mxu0 0
    %687 = vmatpush2.bf16.msra.mxu0 0
    %688 = vmatprep.subr.bf16.mxu0 0
    %689 = vmatpush2.bf16.msra.mxu0 0
    %690 = vmatprep.subr.bf16.mxu0 0
    %691 = vmatpush2.bf16.msra.mxu0 0
    %692 = vmatprep.subr.bf16.mxu0 0
    %693 = vmatpush2.bf16.msra.mxu0 0
    %694 = vmatprep.mubr.bf16.mxu0 0
    %695 = vmatmul.mubr.bf16.gmra.mxu0 %v660
    %v696 = vpop.f32.mrf.mxu0
    %v697 = vadd.f32 0.0, %v696
    %v698 = vpop.f32.mrf.mxu0
    %v699 = vpop.f32.mrf.mxu0
    %v700 = vpop.f32.mrf.mxu0
    %701 = vdwg.mxu0
    %v702 = vpack.c.bf16 %v697, %v697
    %v703 = vpack.c.bf16 %v653, %v653
    %v704 = vld [vmem:[#allocation13] sm:$0xf]
    %v705 = vld [vmem:[#allocation13 + $0x4] sm:$0xf]
    %v706 = vld [vmem:[#allocation13 + $0x8] sm:$0xf]
    %v707 = vld [vmem:[#allocation13 + $0xc] sm:$0xf]
    %v708 = vld [vmem:[#allocation13 + $0x10] sm:$0xf]
    %v709 = vld [vmem:[#allocation13 + $0x14] sm:$0xf]
    %v710 = vld [vmem:[#allocation13 + $0x18] sm:$0xf]
    %v711 = vld [vmem:[#allocation13 + $0x1c] sm:$0xf]
    %v712 = vld [vmem:[#allocation13 + $0x20] sm:$0xf]
    %v713 = vld [vmem:[#allocation13 + $0x24] sm:$0xf]
    %v714 = vld [vmem:[#allocation13 + $0x28] sm:$0xf]
    %v715 = vld [vmem:[#allocation13 + $0x2c] sm:$0xf]
    %v716 = vld [vmem:[#allocation13 + $0x30] sm:$0xf]
    %v717 = vld [vmem:[#allocation13 + $0x34] sm:$0xf]
    %v718 = vld [vmem:[#allocation13 + $0x38] sm:$0xf]
    %v719 = vld [vmem:[#allocation13 + $0x3c] sm:$0xf]
    %v720 = vld [vmem:[#allocation13 + $0x40] sm:$0xf]
    %v721 = vld [vmem:[#allocation13 + $0x44] sm:$0xf]
    %v722 = vld [vmem:[#allocation13 + $0x48] sm:$0xf]
    %v723 = vld [vmem:[#allocation13 + $0x4c] sm:$0xf]
    %v724 = vld [vmem:[#allocation13 + $0x50] sm:$0xf]
    %v725 = vld [vmem:[#allocation13 + $0x54] sm:$0xf]
    %v726 = vld [vmem:[#allocation13 + $0x58] sm:$0xf]
    %v727 = vld [vmem:[#allocation13 + $0x5c] sm:$0xf]
    %v728 = vld [vmem:[#allocation13 + $0x60] sm:$0xf]
    %v729 = vld [vmem:[#allocation13 + $0x64] sm:$0xf]
    %v730 = vld [vmem:[#allocation13 + $0x68] sm:$0xf]
    %v731 = vld [vmem:[#allocation13 + $0x6c] sm:$0xf]
    %v732 = vld [vmem:[#allocation13 + $0x70] sm:$0xf]
    %v733 = vld [vmem:[#allocation13 + $0x74] sm:$0xf]
    %v734 = vld [vmem:[#allocation13 + $0x78] sm:$0xf]
    %v735 = vld [vmem:[#allocation13 + $0x7c] sm:$0xf]
    %v736 = vld [vmem:[%s11] sm:$0x1]
    %v738 = vlaneseq
    %v739 = vshrl.u32 %v738, 7
    %v740 = vsub.s32 0, %v739
    %v741 = vrot.slane %v736, %v740
    %v775 = vunpack.c.l.b16 %v704
    %v776 = vunpack.c.l.b16 %v705
    %v777 = vunpack.c.l.b16 %v706
    %v778 = vunpack.c.l.b16 %v707
    %v779 = vunpack.c.l.b16 %v708
    %v780 = vunpack.c.l.b16 %v709
    %v781 = vunpack.c.l.b16 %v710
    %v782 = vunpack.c.l.b16 %v711
    %v783 = vunpack.c.l.b16 %v712
    %v784 = vunpack.c.l.b16 %v713
    %v785 = vunpack.c.l.b16 %v714
    %v786 = vunpack.c.l.b16 %v715
    %v787 = vunpack.c.l.b16 %v716
    %v788 = vunpack.c.l.b16 %v717
    %v789 = vunpack.c.l.b16 %v718
    %v790 = vunpack.c.l.b16 %v719
    %v791 = vunpack.c.l.b16 %v720
    %v792 = vunpack.c.l.b16 %v721
    %v793 = vunpack.c.l.b16 %v722
    %v794 = vunpack.c.l.b16 %v723
    %v795 = vunpack.c.l.b16 %v724
    %v796 = vunpack.c.l.b16 %v725
    %v797 = vunpack.c.l.b16 %v726
    %v798 = vunpack.c.l.b16 %v727
    %v799 = vunpack.c.l.b16 %v728
    %v800 = vunpack.c.l.b16 %v729
    %v801 = vunpack.c.l.b16 %v730
    %v802 = vunpack.c.l.b16 %v731
    %v803 = vunpack.c.l.b16 %v732
    %v804 = vunpack.c.l.b16 %v733
    %v805 = vunpack.c.l.b16 %v734
    %v806 = vunpack.c.l.b16 %v735
    %v807 = vpack.c.b16 %v776, %v775
    %v808 = vpack.c.b16 %v778, %v777
    %v809 = vpack.c.b16 %v780, %v779
    %v810 = vpack.c.b16 %v782, %v781
    %v811 = vpack.c.b16 %v784, %v783
    %v812 = vpack.c.b16 %v786, %v785
    %v813 = vpack.c.b16 %v788, %v787
    %v814 = vpack.c.b16 %v790, %v789
    %v815 = vpack.c.b16 %v792, %v791
    %v816 = vpack.c.b16 %v794, %v793
    %v817 = vpack.c.b16 %v796, %v795
    %v818 = vpack.c.b16 %v798, %v797
    %v819 = vpack.c.b16 %v800, %v799
    %v820 = vpack.c.b16 %v802, %v801
    %v821 = vpack.c.b16 %v804, %v803
    %v822 = vpack.c.b16 %v806, %v805
    %839 = vmatprep.subr.bf16.mxu0 0
    %840 = vmatpush1.bf16.msra.mxu0 %v814
    %841 = vmatprep.subr.bf16.mxu0 0
    %842 = vmatpush1.bf16.msra.mxu0 %v813
    %843 = vmatprep.subr.bf16.mxu0 0
    %844 = vmatpush1.bf16.msra.mxu0 %v812
    %845 = vmatprep.subr.bf16.mxu0 0
    %846 = vmatpush1.bf16.msra.mxu0 %v811
    %847 = vmatprep.subr.bf16.mxu0 0
    %848 = vmatpush1.bf16.msra.mxu0 %v810
    %849 = vmatprep.subr.bf16.mxu0 0
    %850 = vmatpush1.bf16.msra.mxu0 %v809
    %851 = vmatprep.subr.bf16.mxu0 0
    %852 = vmatpush1.bf16.msra.mxu0 %v808
    %853 = vmatprep.subr.bf16.mxu0 0
    %854 = vmatpush1.bf16.msra.mxu0 %v807
    %855 = vmatprep.subr.bf16.mxu0 0
    %856 = vmatpush2.bf16.msra.mxu0 %v822
    %857 = vmatprep.subr.bf16.mxu0 0
    %858 = vmatpush2.bf16.msra.mxu0 %v821
    %859 = vmatprep.subr.bf16.mxu0 0
    %860 = vmatpush2.bf16.msra.mxu0 %v820
    %861 = vmatprep.subr.bf16.mxu0 0
    %862 = vmatpush2.bf16.msra.mxu0 %v819
    %863 = vmatprep.subr.bf16.mxu0 0
    %864 = vmatpush2.bf16.msra.mxu0 %v818
    %865 = vmatprep.subr.bf16.mxu0 0
    %866 = vmatpush2.bf16.msra.mxu0 %v817
    %867 = vmatprep.subr.bf16.mxu0 0
    %868 = vmatpush2.bf16.msra.mxu0 %v816
    %869 = vmatprep.subr.bf16.mxu0 0
    %870 = vmatpush2.bf16.msra.mxu0 %v815
    %871 = vmatprep.mubr.bf16.mxu0 %v703
    %872 = vmatmul.mubr.bf16.gmra.mxu0 %v702
    %v873 = vpop.f32.mrf.mxu0
    %v874 = vadd.f32 %v741, %v873
    %v875 = vpop.f32.mrf.mxu0
    %v876 = vpop.f32.mrf.mxu0
    %v877 = vpop.f32.mrf.mxu0
    %878 = vdwg.mxu0
    %879 = vst [vmem:[#allocation14] sm:$0xff] %v874
    // Predicated region
    $region78: #{tpu_custom_call.1} parent=1 // pred_check
      _
    $region79: #{tpu_custom_call.1} parent=1 // pred_check_branch
      %881 = sbr.rel (0) target = $region81
    $region80: #{tpu_custom_call.1} parent=1 // pred_region
      %s883 = ssub.s32 128, 128
      %884 = vsyncadd [#allocation4], %s883
      %s886 = sshll.u32 [#allocation14], 4
      %s887 = int_to_ptr.vmem [resolvable:$true] %s886
      %889 = dma.vmem_to_hbm [thread:$0]  %s887, 128, %s12, [#allocation4]
    $region81: #{tpu_custom_call.1} parent=1 // pred_fallthru
      _
    // Predicated region
    $region82: #{tpu_custom_call.1} parent=1 // pred_check
      _
    $region83: #{tpu_custom_call.1} parent=1 // pred_check_branch
      %891 = sbr.rel (0) target = $region85
    $region84: #{tpu_custom_call.1} parent=1 // pred_region
      %892 = dma.done [#allocation4], 128
    $region85: #{tpu_custom_call.1} parent=1 // pred_fallthru
      _
    %893 = vsyncpa [#allocation3], 1
    %894 = vsyncpa [#allocation6], 1
    %895 = vsyncpa [#allocation9], 1
    %896 = vsyncpa [#allocation12], 1
    %897 = vsyncpa [#allocation4], 1

</llo_original>
